<compile_context>
chip_gen: v5e
topology: v5e:2x2
jax: 0.10.0
libtpu: 0.0.40
codegen_flags: <defaults>
</compile_context>

<pallas_src>
import functools

import jax
import jax.numpy as jnp
from jax.experimental import pallas as pl
from jax.experimental.pallas import tpu as pltpu


def _rescal_scores_kernel(q_ref, ent_t_ref, out_ref):
    # q_ref: (B, R) bf16 (resident across tiles)
    # ent_t_ref: (R, TN) bf16 entity tile, lane-dense on the entity axis
    # out_ref: (B, TN) f32, lane-dense on the entity axis
    out_ref[...] = jnp.dot(
        q_ref[...], ent_t_ref[...], preferred_element_type=jnp.float32
    )


def precompute_entity_table(ent_emb):
    """One-time (per parameter update) prep of the scoring table.

    Transposes the (n_ent, rank) f32 entity table to (rank, n_ent_pad) bf16 with the
    large, 128-aligned entity axis on lanes, padded with zeros to a multiple of 128.
    Cache the result alongside the model parameters and pass it to rescal_forward.
    """
    n_ent, _ = ent_emb.shape
    n_ent_pad = pl.cdiv(n_ent, 128) * 128
    ent_t = ent_emb.T.astype(jnp.bfloat16)  # (rank, n_ent)
    if n_ent_pad != n_ent:
        ent_t = jnp.pad(ent_t, ((0, 0), (0, n_ent_pad - n_ent)))
    return ent_t


def _pick_tile_and_vmem(n_ent_pad, rank, batch, requested_tn, vmem_budget_bytes):
    """Largest lane tile (multiple of 128) whose double-buffered footprint fits."""
    # Per entity column: 2 bufs * (rank bf16 in) + 2 bufs * (batch f32 out).
    bytes_per_col = 2 * (2 * rank) + 2 * (4 * batch)
    max_tn = max(128, (vmem_budget_bytes // bytes_per_col) // 128 * 128)
    tn = min(requested_tn, n_ent_pad, max_tn)
    tn = max(128, (tn // 128) * 128)
    needed = bytes_per_col * tn + 2 * (2 * batch * rank)  # + resident q (bf16)
    # Explicit scoped-VMEM limit: above the 16 MiB v5e default, below 64 MiB v7x physical.
    vmem_limit = int(min(max(needed + (4 << 20), 32 << 20), 48 << 20))
    return tn, vmem_limit


@functools.partial(jax.jit, static_argnames=("tn", "vmem_budget_bytes"))
def rescal_forward(queries, ent_emb, rel_emb, ent_t_bf16, *,
                   tn=32768, vmem_budget_bytes=28 << 20):
    """RESCAL forward.

    queries:    (B, 3) int32 triples (lhs, rel, rhs)
    ent_emb:    (n_ent, rank) f32     -- embeddings[0].weight (used for gathers/factors)
    rel_emb:    (n_rel, rank*rank) f32 -- embeddings[1].weight
    ent_t_bf16: (rank, n_ent_pad) bf16 -- cached output of precompute_entity_table
    """
    B = queries.shape[0]
    n_ent, rank = ent_emb.shape
    n_ent_pad = ent_t_bf16.shape[1]

    # --- Embedding gathers (glue, plain JAX; only B rows each). ---
    lhs = ent_emb[queries[:, 0]]                          # (B, R)
    rel = rel_emb[queries[:, 1]].reshape(B, rank, rank)   # (B, R, R)
    rhs = ent_emb[queries[:, 2]]                          # (B, R)

    # --- Hoisted bmm: q depends only on lhs/rel; compute once, not per entity tile. ---
    q = jnp.einsum("bk,bkr->br", lhs, rel,
                   preferred_element_type=jnp.float32)    # (B, R)
    q_bf16 = q.astype(jnp.bfloat16)

    tile_n, vmem_limit = _pick_tile_and_vmem(n_ent_pad, rank, B, tn, vmem_budget_bytes)
    grid = (pl.cdiv(n_ent_pad, tile_n),)

    cost = pl.CostEstimate(
        flops=2 * B * rank * n_ent_pad,
        bytes_accessed=rank * n_ent_pad * 2 + B * rank * 2 + B * n_ent_pad * 4,
        transcendentals=0,
    )

    scores = pl.pallas_call(
        _rescal_scores_kernel,
        out_shape=jax.ShapeDtypeStruct((B, n_ent_pad), jnp.float32),
        grid_spec=pltpu.PrefetchScalarGridSpec(
            num_scalar_prefetch=0,
            grid=grid,
            in_specs=[
                pl.BlockSpec((B, rank), lambda j: (0, 0)),       # q, resident
                pl.BlockSpec((rank, tile_n), lambda j: (0, j)),  # entity tile, lane-dense
            ],
            out_specs=pl.BlockSpec((B, tile_n), lambda j: (0, j)),
        ),
        compiler_params=pltpu.CompilerParams(
            dimension_semantics=("parallel",),
            vmem_limit_bytes=vmem_limit,
        ),
        cost_estimate=cost,
    )(q_bf16, ent_t_bf16)

    if n_ent_pad != n_ent:
        scores = scores[:, :n_ent]

    # Factors returned in f32 (matches the PyTorch module's return contract).
    return scores, [(lhs, rel, rhs)]


def _xavier_uniform(key, shape):
    # torch xavier_uniform_ on a 2-D tensor: fan_out = dim0, fan_in = dim1
    bound = (6.0 / (shape[0] + shape[1])) ** 0.5
    return jax.random.uniform(key, shape, jnp.float32, -bound, bound)


if __name__ == "__main__":
    # Small model hyper-params consistent with RESCAL(sizes, rank).
    # n_entities is deliberately NOT a multiple of 128 to exercise the padded/cdiv path.
    n_entities = 500
    n_relations = 8
    rank = 32
    batch = 8

    key = jax.random.PRNGKey(0)
    k_ent, k_rel, k_q = jax.random.split(key, 3)

    ent_emb = _xavier_uniform(k_ent, (n_entities, rank))          # embeddings[0].weight
    rel_emb = _xavier_uniform(k_rel, (n_relations, rank * rank))  # embeddings[1].weight

    queries = jnp.stack(
        [
            jax.random.randint(jax.random.fold_in(k_q, 0), (batch,), 0, n_entities),
            jax.random.randint(jax.random.fold_in(k_q, 1), (batch,), 0, n_relations),
            jax.random.randint(jax.random.fold_in(k_q, 2), (batch,), 0, n_entities),
        ],
        axis=1,
    ).astype(jnp.int32)  # (B, 3)

    # One-time cache of the transposed/padded bf16 entity table (model parameter).
    ent_t_bf16 = jax.block_until_ready(precompute_entity_table(ent_emb))

    scores, factors = rescal_forward(queries, ent_emb, rel_emb, ent_t_bf16)
    scores = jax.block_until_ready(scores)
    assert scores.shape == (batch, n_entities)

    # Reference 1: same bf16 input rounding as the kernel, f32 accumulation.
    lhs_r, rel_r, rhs_r = factors[0]
    q_ref = jnp.einsum("bk,bkr->br", lhs_r, rel_r, preferred_element_type=jnp.float32)
    scores_bf16_ref = jnp.dot(
        q_ref.astype(jnp.bfloat16).astype(jnp.float32),
        ent_emb.T.astype(jnp.bfloat16).astype(jnp.float32),
        preferred_element_type=jnp.float32,
    )
    assert jnp.allclose(scores, scores_bf16_ref, atol=1e-4, rtol=1e-3)

    # Reference 2: full-precision f32 semantics (loose tolerance for the bf16 stream).
    scores_f32_ref = q_ref @ ent_emb.T
    assert jnp.allclose(scores, scores_f32_ref, atol=2e-3, rtol=2e-2)

    print("KERNEL_OK")
</pallas_src>

<mosaic_0001>
module attributes {stable_mosaic.version = 11 : i64} {
  func.func @_rescal_scores_kernel(%arg0: i32, %arg1: memref<8x32xbf16, #tpu.memory_space<vmem>>, %arg2: memref<32x512xbf16, #tpu.memory_space<vmem>>, %arg3: memref<8x512xf32, #tpu.memory_space<vmem>>) attributes {dimension_semantics = [#tpu.dimension_semantics<parallel>], iteration_bounds = array<i64: 1>, scalar_prefetch = 0 : i64, scratch_operands = 0 : i64, tpu.core_type = #tpu.core_type<tc>, window_params = [{pipeline_mode = #tpu.pipeline_mode<synchronous>, transform_indices = @transform_0, window_bounds = array<i64: 8, 32>}, {transform_indices = @transform_1, window_bounds = array<i64: 32, 512>}, {transform_indices = @transform_2, window_bounds = array<i64: 8, 512>}]} {
    %c0 = arith.constant 0 : index
    %c0_0 = arith.constant 0 : index
    %0 = vector.load %arg1[%c0, %c0_0] : memref<8x32xbf16, #tpu.memory_space<vmem>>, vector<8x32xbf16>
    %c0_1 = arith.constant 0 : index
    %c0_2 = arith.constant 0 : index
    %1 = vector.load %arg2[%c0_1, %c0_2] : memref<32x512xbf16, #tpu.memory_space<vmem>>, vector<32x512xbf16>
    %cst = arith.constant dense<0.000000e+00> : vector<8x512xf32>
    %2 = tpu.matmul %0, %1, %cst {dimension_numbers = #tpu.dot_dimension_numbers<[1], [0], [0], [1], [0, 0, 1, 1], [], []>} : vector<8x32xbf16>, vector<32x512xbf16>, vector<8x512xf32> -> vector<8x512xf32>
    %c0_3 = arith.constant 0 : index
    %c0_4 = arith.constant 0 : index
    %3 = vector.load %arg3[%c0_3, %c0_4] : memref<8x512xf32, #tpu.memory_space<vmem>>, vector<8x512xf32>
    tpu.vector_store %arg3[%c0_3, %c0_4], %2 {strides = array<i32>} : memref<8x512xf32, #tpu.memory_space<vmem>>, vector<8x512xf32>,
    return
  }
  func.func @transform_0(%arg0: i32) -> (i32, i32) {
    %c0_i32 = arith.constant 0 : i32
    %c0_i32_0 = arith.constant 0 : i32
    %c0_i32_1 = arith.constant 0 : i32
    return %c0_i32, %c0_i32_0 : i32, i32
  }
  func.func @transform_1(%arg0: i32) -> (i32, i32) {
    %c0_i32 = arith.constant 0 : i32
    %c0_i32_0 = arith.constant 0 : i32
    return %c0_i32, %arg0 : i32, i32
  }
  func.func @transform_2(%arg0: i32) -> (i32, i32) {
    %c0_i32 = arith.constant 0 : i32
    %c0_i32_0 = arith.constant 0 : i32
    return %c0_i32, %arg0 : i32, i32
  }
}

</mosaic_0001>

<llo_original>
// kernel: rescal_forward.1
$region0: #{rescal_forward.1}
  #allocation0 [shape = 'u32[]', space=smem, size = 0x4, offset = 0x4, fixed_abs, tag = 'smem constant byte address 0x4 - core index']
  #allocation1 [shape = 'u32[72,128]{1,0:T(1,128)}', space=vmem, size = 0x9000, scoped, tag = 'internal scratch']
  %s0 = inlined_call_operand.vmem [shape: bf16[8,32], index: 0, kind: input, shape index: {}]
  %s1 = inlined_call_operand.vmem [shape: bf16[32,512], index: 1, kind: input, shape index: {}]
  %s2 = inlined_call_operand.hbm [shape: f32[8,512], index: 2, kind: output, shape index: {}]
  %s3 = sld [smem:[#allocation0]]
  $region18: #{rescal_forward.1} parent=0
    _
  %s5 = ssub.s32 1, %s3
  %s6 = scalar_select 0, %s5, %s3
  $region1: #{rescal_forward.1} parent=0
    #allocation2 [shape = 'u8[16384]{0}', space=vmem, size = 0x4000, scoped, tag = 'output window, operand 0, single buffered']
    #allocation3 [shape = 's32[1]{0}', space=sflag, size = 0x4, scoped, tag = 'scoped memory for rescal_forward.1']
    %7 = vsyncpa [#allocation3], 0
    // Predicated region
    $region2: #{rescal_forward.1} parent=1 // pred_check
      _
    $region3: #{rescal_forward.1} parent=1 // pred_check_branch
      %9 = sbr.rel (0) target = $region5
    $region4: #{rescal_forward.1} parent=1 // pred_region
      _
    $region5: #{rescal_forward.1} parent=1 // pred_fallthru
      _
    // Predicated region
    $region6: #{rescal_forward.1} parent=1 // pred_check
      _
    $region7: #{rescal_forward.1} parent=1 // pred_check_branch
      %11 = sbr.rel (0) target = $region9
    $region8: #{rescal_forward.1} parent=1 // pred_region
      _
    $region9: #{rescal_forward.1} parent=1 // pred_fallthru
      _
    %v13 = vld [vmem:[%s0] sm:$0xf]
    %v14 = vld [vmem:[%s1] sm:$0xff]
    %v15 = vld [vmem:[%s1 + $0x8] sm:$0xff]
    %v16 = vld [vmem:[%s1 + $0x10] sm:$0xff]
    %v17 = vld [vmem:[%s1 + $0x18] sm:$0xff]
    %v18 = vld [vmem:[%s1 + $0x20] sm:$0xff]
    %v19 = vld [vmem:[%s1 + $0x28] sm:$0xff]
    %v20 = vld [vmem:[%s1 + $0x30] sm:$0xff]
    %v21 = vld [vmem:[%s1 + $0x38] sm:$0xff]
    %v30 = vunpack.c.l.b16 %v14
    %v31 = vunpack.c.h.b16 %v14
    %v32 = vunpack.c.l.b16 %v15
    %v33 = vunpack.c.h.b16 %v15
    %v34 = vunpack.c.l.b16 %v16
    %v35 = vunpack.c.h.b16 %v16
    %v36 = vunpack.c.l.b16 %v17
    %v37 = vunpack.c.h.b16 %v17
    %v38 = vunpack.c.l.b16 %v18
    %v39 = vunpack.c.h.b16 %v18
    %v40 = vunpack.c.l.b16 %v19
    %v41 = vunpack.c.h.b16 %v19
    %v42 = vunpack.c.l.b16 %v20
    %v43 = vunpack.c.h.b16 %v20
    %v44 = vunpack.c.l.b16 %v21
    %v45 = vunpack.c.h.b16 %v21
    %v46 = vpack.c.b16 %v34, %v30
    %v47 = vpack.c.b16 %v35, %v31
    %v48 = vpack.c.b16 %v36, %v32
    %v49 = vpack.c.b16 %v37, %v33
    %v50 = vpack.c.b16 %v42, %v38
    %v51 = vpack.c.b16 %v43, %v39
    %v52 = vpack.c.b16 %v44, %v40
    %v53 = vpack.c.b16 %v45, %v41
    %vm62 = vcmask 261120
    %v64 = vsel %vm62, %v13, 0
    %66 = vmatpush.bf16.msra.mxu0 0
    %67 = vmatpush.bf16.msra.mxu0 0
    %68 = vmatpush.bf16.msra.mxu0 0
    %69 = vmatpush.bf16.msra.mxu0 0
    %70 = vmatpush.bf16.msra.mxu0 0
    %71 = vmatpush.bf16.msra.mxu0 0
    %72 = vmatpush.bf16.msra.mxu0 %v50
    %73 = vmatpush.bf16.msra.mxu0 %v46
    %74 = vmatmul.bf16.gmra.mxu0 %v64
    %v75 = vpop.f32.mrf.mxu0
    %v76 = vadd.f32 0.0, %v75
    %v77 = vpop.f32.mrf.mxu0
    %78 = vdwg.mxu0
    %79 = vmatpush.bf16.msra.mxu0 0
    %80 = vmatpush.bf16.msra.mxu0 0
    %81 = vmatpush.bf16.msra.mxu0 0
    %82 = vmatpush.bf16.msra.mxu0 0
    %83 = vmatpush.bf16.msra.mxu0 0
    %84 = vmatpush.bf16.msra.mxu0 0
    %85 = vmatpush.bf16.msra.mxu0 %v51
    %86 = vmatpush.bf16.msra.mxu0 %v47
    %87 = vmatmul.bf16.gmra.mxu0 %v64
    %v88 = vpop.f32.mrf.mxu0
    %v89 = vadd.f32 0.0, %v88
    %v90 = vpop.f32.mrf.mxu0
    %91 = vdwg.mxu0
    %92 = vmatpush.bf16.msra.mxu0 0
    %93 = vmatpush.bf16.msra.mxu0 0
    %94 = vmatpush.bf16.msra.mxu0 0
    %95 = vmatpush.bf16.msra.mxu0 0
    %96 = vmatpush.bf16.msra.mxu0 0
    %97 = vmatpush.bf16.msra.mxu0 0
    %98 = vmatpush.bf16.msra.mxu0 %v52
    %99 = vmatpush.bf16.msra.mxu0 %v48
    %100 = vmatmul.bf16.gmra.mxu0 %v64
    %v101 = vpop.f32.mrf.mxu0
    %v102 = vadd.f32 0.0, %v101
    %v103 = vpop.f32.mrf.mxu0
    %104 = vdwg.mxu0
    %105 = vmatpush.bf16.msra.mxu0 0
    %106 = vmatpush.bf16.msra.mxu0 0
    %107 = vmatpush.bf16.msra.mxu0 0
    %108 = vmatpush.bf16.msra.mxu0 0
    %109 = vmatpush.bf16.msra.mxu0 0
    %110 = vmatpush.bf16.msra.mxu0 0
    %111 = vmatpush.bf16.msra.mxu0 %v53
    %112 = vmatpush.bf16.msra.mxu0 %v49
    %113 = vmatmul.bf16.gmra.mxu0 %v64
    %v114 = vpop.f32.mrf.mxu0
    %v115 = vadd.f32 0.0, %v114
    %v116 = vpop.f32.mrf.mxu0
    %117 = vdwg.mxu0
    %118 = vst [vmem:[#allocation2] sm:$0xff] %v76
    %119 = vst [vmem:[#allocation2 + $0x8] sm:$0xff] %v89
    %120 = vst [vmem:[#allocation2 + $0x10] sm:$0xff] %v102
    %121 = vst [vmem:[#allocation2 + $0x18] sm:$0xff] %v115
    // Predicated region
    $region10: #{rescal_forward.1} parent=1 // pred_check
      _
    $region11: #{rescal_forward.1} parent=1 // pred_check_branch
      %123 = sbr.rel (0) target = $region13
    $region12: #{rescal_forward.1} parent=1 // pred_region
      %125 = vsyncadd [#allocation3], 0
      %s127 = sshll.u32 [#allocation2], 4
      %s128 = int_to_ptr.vmem [resolvable:$true] %s127
      %s129 = sshll.u32 %s2, 4
      %s130 = int_to_ptr.hbm [resolvable:$true] %s129
      %132 = dma.vmem_to_hbm [thread:$0]  %s128, 512, %s130, [#allocation3]
    $region13: #{rescal_forward.1} parent=1 // pred_fallthru
      _
    // Predicated region
    $region14: #{rescal_forward.1} parent=1 // pred_check
      _
    $region15: #{rescal_forward.1} parent=1 // pred_check_branch
      %134 = sbr.rel (0) target = $region17
    $region16: #{rescal_forward.1} parent=1 // pred_region
      %136 = dma.done [#allocation3], 512
    $region17: #{rescal_forward.1} parent=1 // pred_fallthru
      _
    %137 = vsyncpa [#allocation3], 1

</llo_original>
